<compile_context>
chip_gen: v5e
topology: v5e:2x2
jax: 0.10.0
libtpu: 0.0.40
codegen_flags: <defaults>
</compile_context>

<pallas_src>
import math
from functools import partial

import jax
import jax.numpy as jnp
from jax.experimental import pallas as pl
from jax.experimental.pallas import tpu as pltpu


# --------------------------------------------------------------------------- #
# Kernels
# --------------------------------------------------------------------------- #
def _grn_fused_kernel(x_ref, gamma_ref, beta_ref, o_ref, *, S, C):
    """Single-pass GRN for one batch element.

    x_ref             : (R, L) with L = S*C; lane l = s*C + c (s = spatial sub-idx)
    gamma_ref/beta_ref: (1, L) f32, pre-tiled S times (lane l -> channel c)
    o_ref             : (R, L), same dtype as the input
    """
    # ---- reduction: f32 sum of squares over the row (spatial) axis ----------
    xf = x_ref[...].astype(jnp.float32)
    sq = jnp.sum(xf * xf, axis=0, keepdims=True)               # (1, L) per-lane
    # Fold the S lane groups so every lane carries its channel's full spatial
    # sum: log2(S) cyclic lane rotations (XLU slot, cheap) + adds.
    tot = sq
    shift = C
    while shift < S * C:                                       # S is a power of 2
        tot = tot + pltpu.roll(tot, shift=shift, axis=1)
        shift *= 2
    gx = jnp.sqrt(tot)                                         # ||x||_2 per channel (replicated)
    # Mean over channels == mean over lanes (each channel appears S times).
    denom = jnp.mean(gx, axis=-1, keepdims=True) + 1e-6        # (1, 1)
    inv = pl.reciprocal(denom, approx=True)                    # EUP slot
    inv = inv * (2.0 - denom * inv)                            # Newton refine (x2)
    inv = inv * (2.0 - denom * inv)                            # -> ~f32 exact
    coef = gamma_ref[...] * (gx * inv) + 1.0                   # (1, L) f32
    # ---- epilogue: y = x*coef + beta — one mul + one add, in input dtype ----
    x = x_ref[...]
    o_ref[...] = (x * coef.astype(x.dtype)
                  + beta_ref[...].astype(x.dtype)).astype(o_ref.dtype)


def _grn_sumsq_kernel(x_ref, sums_ref, *, T, R):
    """Pass 1 (tiled path): accumulate per-lane sum of squares in f32."""
    t = pl.program_id(1)

    @pl.when(t == 0)
    def _():
        sums_ref[...] = jnp.zeros_like(sums_ref)

    xf = x_ref[...].astype(jnp.float32)
    if R % T != 0:  # static: mask the padded tail of the last row tile
        row = jax.lax.broadcasted_iota(jnp.int32, xf.shape, 0) + t * T
        xf = jnp.where(row < R, xf, 0.0)
    sums_ref[...] += jnp.sum(xf * xf, axis=0, keepdims=True)


def _grn_apply_kernel(x_ref, coef_ref, beta_ref, o_ref):
    """Pass 2 (tiled path): y = x*coef + beta over one (T, L) tile."""
    x = x_ref[...]
    o_ref[...] = (x * coef_ref[...].astype(x.dtype)
                  + beta_ref[...].astype(x.dtype)).astype(o_ref.dtype)


# --------------------------------------------------------------------------- #
# Wrapper helpers
# --------------------------------------------------------------------------- #
def _lane_pack_factor(HW, C):
    # Number of consecutive spatial positions folded into the lane axis so the
    # flattened last dim S*C is a multiple of 128 (lane-dense vregs/DMA).
    # S is a power of two by construction; degrade until it divides HW.
    S = 128 // math.gcd(C, 128)
    while S > 1 and HW % S != 0:
        S //= 2
    return S


def _pick_row_tile(R, row_tile):
    """Row-tile for the two-pass path: multiple of 8, prefer divisors of R."""
    row_tile = max(8, (row_tile // 8) * 8)
    if R <= row_tile:
        return R
    for t in range(row_tile, 7, -8):   # largest divisor of R that is 8-aligned
        if R % t == 0:
            return t
    return row_tile                     # no clean divisor: mask the tail tile


# --------------------------------------------------------------------------- #
# Wrapper
# --------------------------------------------------------------------------- #
@partial(jax.jit, static_argnames=("vmem_budget_bytes", "row_tile"))
def grn(x, gamma, beta, *, vmem_budget_bytes=24 * 1024 * 1024, row_tile=512):
    """GRN forward. x: (N, H, W, C) NHWC; gamma, beta: (1, 1, 1, C)."""
    N, H, W, C = x.shape
    HW = H * W
    S = _lane_pack_factor(HW, C)
    R, L = HW // S, S * C

    x3 = x.reshape(N, R, L)                                    # free row-major reshape
    gamma_l = jnp.tile(gamma.reshape(1, C).astype(jnp.float32), (1, S))  # (1, L)
    beta_l = jnp.tile(beta.reshape(1, C).astype(jnp.float32), (1, S))    # (1, L)

    itemsize = jnp.dtype(x.dtype).itemsize
    fused_bytes = 4 * R * L * itemsize        # in + out, each double-buffered
    # Fused single pass if the per-batch block fits the VMEM budget and there
    # is enough batch-level grid work; otherwise bounded two-pass path.
    use_fused = (fused_bytes <= vmem_budget_bytes) and not (N == 1 and R >= 4 * row_tile)

    if use_fused:
        vmem_limit = int(min(56 << 20, max(32 << 20, fused_bytes + (8 << 20))))
        out3 = pl.pallas_call(
            partial(_grn_fused_kernel, S=S, C=C),
            out_shape=jax.ShapeDtypeStruct((N, R, L), x.dtype),
            grid_spec=pltpu.PrefetchScalarGridSpec(
                num_scalar_prefetch=0,
                grid=(N,),
                in_specs=[
                    pl.BlockSpec((None, R, L), lambda n: (n, 0, 0)),
                    pl.BlockSpec((1, L), lambda n: (0, 0)),
                    pl.BlockSpec((1, L), lambda n: (0, 0)),
                ],
                out_specs=pl.BlockSpec((None, R, L), lambda n: (n, 0, 0)),
            ),
            compiler_params=pltpu.CompilerParams(
                dimension_semantics=("parallel",),
                vmem_limit_bytes=vmem_limit,
            ),
        )(x3, gamma_l, beta_l)
        return out3.reshape(N, H, W, C)

    # ---- two-pass spatially-tiled path (bounded VMEM footprint) -------------
    T = _pick_row_tile(R, row_tile)
    n_t = pl.cdiv(R, T)
    vmem_limit = int(min(56 << 20, max(32 << 20, 4 * T * L * itemsize + (8 << 20))))

    # Pass 1: per-(batch, lane) sum of squares, accumulated across row tiles.
    sums = pl.pallas_call(
        partial(_grn_sumsq_kernel, T=T, R=R),
        out_shape=jax.ShapeDtypeStruct((N, L), jnp.float32),
        grid_spec=pltpu.PrefetchScalarGridSpec(
            num_scalar_prefetch=0,
            grid=(N, n_t),
            in_specs=[pl.BlockSpec((None, T, L), lambda n, t: (n, t, 0))],
            out_specs=pl.BlockSpec((1, L), lambda n, t: (n, 0)),
        ),
        compiler_params=pltpu.CompilerParams(
            dimension_semantics=("parallel", "arbitrary"),
            vmem_limit_bytes=vmem_limit,
        ),
    )(x3)

    # Tiny per-(batch, channel) math outside the kernel: fold the S lane
    # groups, norm, channel mean, and fold gamma into a single coefficient.
    per_chan = jnp.sum(sums.reshape(N, S, C), axis=1)          # (N, C)
    gx = jnp.sqrt(per_chan)
    nx = gx / (jnp.mean(gx, axis=-1, keepdims=True) + 1e-6)
    coef = jnp.tile(gamma.reshape(1, C).astype(jnp.float32) * nx + 1.0, (1, S))  # (N, L)

    # Pass 2: elementwise y = x*coef + beta, fully parallel grid.
    out3 = pl.pallas_call(
        _grn_apply_kernel,
        out_shape=jax.ShapeDtypeStruct((N, R, L), x.dtype),
        grid_spec=pltpu.PrefetchScalarGridSpec(
            num_scalar_prefetch=0,
            grid=(N, n_t),
            in_specs=[
                pl.BlockSpec((None, T, L), lambda n, t: (n, t, 0)),
                pl.BlockSpec((1, L), lambda n, t: (n, 0)),
                pl.BlockSpec((1, L), lambda n, t: (0, 0)),
            ],
            out_specs=pl.BlockSpec((None, T, L), lambda n, t: (n, t, 0)),
        ),
        compiler_params=pltpu.CompilerParams(
            dimension_semantics=("parallel", "parallel"),
            vmem_limit_bytes=vmem_limit,
        ),
    )(x3, coef, beta_l)
    return out3.reshape(N, H, W, C)


# --------------------------------------------------------------------------- #
# Pure-JAX reference matching the PyTorch forward exactly
# --------------------------------------------------------------------------- #
def grn_reference(x, gamma, beta):
    xf = x.astype(jnp.float32)
    gx = jnp.sqrt(jnp.sum(xf * xf, axis=(1, 2), keepdims=True))
    nx = gx / (jnp.mean(gx, axis=-1, keepdims=True) + 1e-6)
    return (gamma * (xf * nx) + beta + xf).astype(x.dtype)


if __name__ == "__main__":
    key = jax.random.PRNGKey(0)
    kx, kg, kb = jax.random.split(key, 3)

    N, H, W, C = 2, 16, 16, 32
    x = jax.random.normal(kx, (N, H, W, C), dtype=jnp.float32)
    # PyTorch __init__ zero-inits gamma/beta; use small non-zero values so the
    # gamma/beta path is actually exercised.
    gamma = 0.1 * jax.random.normal(kg, (1, 1, 1, C), dtype=jnp.float32)
    beta = 0.1 * jax.random.normal(kb, (1, 1, 1, C), dtype=jnp.float32)

    ref = grn_reference(x, gamma, beta)

    # 1) Fused single-pass path: (256, 32) per batch is lane-packed to (64, 128).
    out = jax.block_until_ready(grn(x, gamma, beta))
    assert out.shape == (N, H, W, C)
    assert jnp.allclose(out, ref, atol=1e-5, rtol=1e-5), "fused path mismatch"

    # 2) Two-pass tiled path, forced via a zero VMEM budget; row_tile=32
    #    divides R=64 exactly -> no tail masking, cross-tile accumulation.
    out_tiled = jax.block_until_ready(
        grn(x, gamma, beta, vmem_budget_bytes=0, row_tile=32))
    assert jnp.allclose(out_tiled, ref, atol=1e-5, rtol=1e-5), "tiled path mismatch"

    # 3) Two-pass tiled path with a non-dividing tile (R=36, T=16) to exercise
    #    the masked partial last tile.
    x2 = jax.random.normal(kx, (1, 12, 12, C), dtype=jnp.float32)
    ref2 = grn_reference(x2, gamma, beta)
    out2 = jax.block_until_ready(
        grn(x2, gamma, beta, vmem_budget_bytes=0, row_tile=16))
    assert jnp.allclose(out2, ref2, atol=1e-5, rtol=1e-5), "masked-tile path mismatch"

    # 4) bf16 input: reduction in f32, epilogue in bf16 (no f32 tile copy).
    xb = x.astype(jnp.bfloat16)
    out_b = jax.block_until_ready(grn(xb, gamma, beta))
    ref_b = grn_reference(xb.astype(jnp.float32), gamma, beta)
    assert jnp.allclose(out_b.astype(jnp.float32), ref_b, atol=6e-2, rtol=6e-2), \
        "bf16 path mismatch"

    print("KERNEL_OK")
</pallas_src>

<mosaic_0001>
module attributes {stable_mosaic.version = 11 : i64} {
  func.func @_grn_fused_kernel(%arg0: i32, %arg1: memref<1x64x128xf32, #tpu.memory_space<vmem>>, %arg2: memref<1x128xf32, #tpu.memory_space<vmem>>, %arg3: memref<1x128xf32, #tpu.memory_space<vmem>>, %arg4: memref<1x64x128xf32, #tpu.memory_space<vmem>>) attributes {dimension_semantics = [#tpu.dimension_semantics<parallel>], iteration_bounds = array<i64: 2>, scalar_prefetch = 0 : i64, scratch_operands = 0 : i64, tpu.core_type = #tpu.core_type<tc>, window_params = [{transform_indices = @transform_0, window_bounds = array<i64: 1, 64, 128>}, {pipeline_mode = #tpu.pipeline_mode<synchronous>, transform_indices = @transform_1, window_bounds = array<i64: 1, 128>}, {pipeline_mode = #tpu.pipeline_mode<synchronous>, transform_indices = @transform_2, window_bounds = array<i64: 1, 128>}, {transform_indices = @transform_3, window_bounds = array<i64: 1, 64, 128>}]} {
    %c0 = arith.constant 0 : index
    %c0_0 = arith.constant 0 : index
    %c0_1 = arith.constant 0 : index
    %0 = vector.load %arg1[%c0, %c0_0, %c0_1] : memref<1x64x128xf32, #tpu.memory_space<vmem>>, vector<1x64x128xf32>
    %1 = vector.shape_cast %0 : vector<1x64x128xf32> to vector<64x128xf32>
    %2 = arith.mulf %1, %1 : vector<64x128xf32>
    %cst = arith.constant dense<0.000000e+00> : vector<128xf32>
    %3 = vector.multi_reduction <add>, %2, %cst [0] : vector<64x128xf32> to vector<128xf32>
    %4 = vector.shape_cast %3 : vector<128xf32> to vector<1x128xf32>
    %c32_i32 = arith.constant 32 : i32
    %5 = tpu.dynamic_rotate %4 by %c32_i32 dim 1 : vector<1x128xf32>, i32 -> vector<1x128xf32>
    %6 = arith.addf %4, %5 : vector<1x128xf32>
    %c64_i32 = arith.constant 64 : i32
    %7 = tpu.dynamic_rotate %6 by %c64_i32 dim 1 : vector<1x128xf32>, i32 -> vector<1x128xf32>
    %8 = arith.addf %6, %7 : vector<1x128xf32>
    %9 = math.sqrt %8 : vector<1x128xf32>
    %cst_2 = arith.constant dense<0.000000e+00> : vector<1xf32>
    %10 = vector.multi_reduction <add>, %9, %cst_2 [1] : vector<1x128xf32> to vector<1xf32>
    %11 = vector.shape_cast %10 : vector<1xf32> to vector<1x1xf32>
    %cst_3 = arith.constant 1.280000e+02 : f32
    %12 = vector.broadcast %cst_3 : f32 to vector<1x1xf32>
    %13 = arith.divf %11, %12 : vector<1x1xf32>
    %cst_4 = arith.constant 9.99999997E-7 : f32
    %14 = vector.broadcast %cst_4 : f32 to vector<1x1xf32>
    %15 = arith.addf %13, %14 : vector<1x1xf32>
    %16 = tpu.reciprocal %15 {approx = true} : vector<1x1xf32> -> vector<1x1xf32>
    %17 = arith.mulf %15, %16 : vector<1x1xf32>
    %cst_5 = arith.constant 2.000000e+00 : f32
    %18 = vector.broadcast %cst_5 : f32 to vector<1x1xf32>
    %19 = arith.subf %18, %17 : vector<1x1xf32>
    %20 = arith.mulf %16, %19 : vector<1x1xf32>
    %21 = arith.mulf %15, %20 : vector<1x1xf32>
    %cst_6 = arith.constant 2.000000e+00 : f32
    %22 = vector.broadcast %cst_6 : f32 to vector<1x1xf32>
    %23 = arith.subf %22, %21 : vector<1x1xf32>
    %24 = arith.mulf %20, %23 : vector<1x1xf32>
    %c0_7 = arith.constant 0 : index
    %c0_8 = arith.constant 0 : index
    %25 = vector.load %arg2[%c0_7, %c0_8] : memref<1x128xf32, #tpu.memory_space<vmem>>, vector<1x128xf32>
    %26 = vector.broadcast %24 : vector<1x1xf32> to vector<1x128xf32>
    %27 = arith.mulf %9, %26 : vector<1x128xf32>
    %28 = arith.mulf %25, %27 : vector<1x128xf32>
    %cst_9 = arith.constant 1.000000e+00 : f32
    %29 = vector.broadcast %cst_9 : f32 to vector<1x128xf32>
    %30 = arith.addf %28, %29 : vector<1x128xf32>
    %c0_10 = arith.constant 0 : index
    %c0_11 = arith.constant 0 : index
    %c0_12 = arith.constant 0 : index
    %31 = vector.load %arg1[%c0_10, %c0_11, %c0_12] : memref<1x64x128xf32, #tpu.memory_space<vmem>>, vector<1x64x128xf32>
    %32 = vector.shape_cast %31 : vector<1x64x128xf32> to vector<64x128xf32>
    %33 = vector.broadcast %30 : vector<1x128xf32> to vector<64x128xf32>
    %34 = arith.mulf %32, %33 : vector<64x128xf32>
    %c0_13 = arith.constant 0 : index
    %c0_14 = arith.constant 0 : index
    %35 = vector.load %arg3[%c0_13, %c0_14] : memref<1x128xf32, #tpu.memory_space<vmem>>, vector<1x128xf32>
    %36 = vector.broadcast %35 : vector<1x128xf32> to vector<64x128xf32>
    %37 = arith.addf %34, %36 : vector<64x128xf32>
    %c0_15 = arith.constant 0 : index
    %c0_16 = arith.constant 0 : index
    %c0_17 = arith.constant 0 : index
    %38 = vector.load %arg4[%c0_15, %c0_16, %c0_17] : memref<1x64x128xf32, #tpu.memory_space<vmem>>, vector<1x64x128xf32>
    %39 = vector.shape_cast %38 : vector<1x64x128xf32> to vector<64x128xf32>
    %40 = vector.shape_cast %37 : vector<64x128xf32> to vector<1x64x128xf32>
    tpu.vector_store %arg4[%c0_15, %c0_16, %c0_17], %40 {strides = array<i32>} : memref<1x64x128xf32, #tpu.memory_space<vmem>>, vector<1x64x128xf32>,
    return
  }
  func.func @transform_0(%arg0: i32) -> (i32, i32, i32) {
    %c0_i32 = arith.constant 0 : i32
    %c0_i32_0 = arith.constant 0 : i32
    %c0_i32_1 = arith.constant 0 : i32
    return %arg0, %c0_i32, %c0_i32_0 : i32, i32, i32
  }
  func.func @transform_1(%arg0: i32) -> (i32, i32) {
    %c0_i32 = arith.constant 0 : i32
    %c0_i32_0 = arith.constant 0 : i32
    %c0_i32_1 = arith.constant 0 : i32
    return %c0_i32, %c0_i32_0 : i32, i32
  }
  func.func @transform_2(%arg0: i32) -> (i32, i32) {
    %c0_i32 = arith.constant 0 : i32
    %c0_i32_0 = arith.constant 0 : i32
    %c0_i32_1 = arith.constant 0 : i32
    return %c0_i32, %c0_i32_0 : i32, i32
  }
  func.func @transform_3(%arg0: i32) -> (i32, i32, i32) {
    %c0_i32 = arith.constant 0 : i32
    %c0_i32_0 = arith.constant 0 : i32
    %c0_i32_1 = arith.constant 0 : i32
    return %arg0, %c0_i32, %c0_i32_0 : i32, i32, i32
  }
}

</mosaic_0001>

<llo_original>
// kernel: grn.1
$region0: #{grn.1}
  #allocation0 [shape = 'u32[]', space=smem, size = 0x4, offset = 0x4, fixed_abs, tag = 'smem constant byte address 0x4 - core index']
  #allocation1 [shape = 'u32[72,128]{1,0:T(1,128)}', space=vmem, size = 0x9000, scoped, tag = 'internal scratch']
  %s0 = inlined_call_operand.vmem [shape: f32[2,64,128], index: 0, kind: input, shape index: {}]
  %s1 = inlined_call_operand.vmem [shape: f32[1,128], index: 1, kind: input, shape index: {}]
  %s2 = inlined_call_operand.vmem [shape: f32[1,128], index: 2, kind: input, shape index: {}]
  %s3 = inlined_call_operand.vmem [shape: f32[2,64,128], index: 3, kind: output, shape index: {}]
  %s4 = sld [smem:[#allocation0]]
  $region45: #{grn.1} parent=0
    _
  %s6 = ssub.s32 1, %s4
  %s7 = scalar_select 0, %s6, %s4
  loop: start=0, step=1, limit=4
  $region2: #{grn.1} parent=0 // loop_pre_header
    _
  $region3: #{grn.1} parent=0 // loop_header
    %s9 = sphi 0, %s13
    %p10 = scmp.ge.s32.totalorder %s9, 4
    %s19 = sphi 0, %s21
    %s22 = sphi 0, %s19
    %s23 = sphi 0, %s22
    %s39 = sphi 0, %s23
    %s43 = sphi 0, %s43
    %s45 = sphi 0, %s43
    %s46 = sphi 0, %s45
    %s60 = sphi 0, %s46
    %s64 = sphi 0, %s64
    %s66 = sphi 0, %s64
    %s67 = sphi 0, %s66
    %s81 = sphi 0, %s67
    %s87 = sphi 0, %s89
    %s90 = sphi 0, %s87
    %s91 = sphi 0, %s90
    %s107 = sphi 0, %s91
  $region4: #{grn.1} parent=0 // loop_header_branch
    %12 = sbr.rel (%p10) target = $region8
  $region5: #{grn.1} parent=0 // loop_body
    %s14 = ssub.s32 %s9, 1
    %s15 = ssub.s32 %s9, 2
    %s16 = sadd.s32 %s9, 1
    %s17 = ssub.s32 %s9, %s16
    %p18 = scmp.eq.s32.totalorder %s17, 0
    %s20 = sadd.s32 %s19, 1
    %s21 = scalar_select %p18, %s19, %s20
    %p24 = pneg %p18
    %p25 = scmp.eq.s32.totalorder %s9, 1
    %p26 = por %p24, %p25
    %p27 = scmp.ne.s32.totalorder %s19, %s22
    %p28 = scmp.eq.s32.totalorder %s9, 0
    %p29 = por %p27, %p28
    %p30 = scmp.ne.s32.totalorder %s19, %s22
    %p31 = scmp.eq.s32.totalorder %s14, 1
    %p32 = por %p30, %p31
    %p33 = scmp.ne.s32.totalorder %s22, %s23
    %p34 = scmp.eq.s32.totalorder %s14, 0
    %p35 = por %p33, %p34
    %p36 = scmp.ne.s32.totalorder %s22, %s23
    %p37 = scmp.eq.s32.totalorder %s15, 1
    %p38 = por %p36, %p37
    %p40 = scmp.ne.s32.totalorder %s23, %s39
    %p41 = scmp.eq.s32.totalorder %s15, 0
    %p42 = por %p40, %p41
    %s44 = sadd.s32 %s43, 1
    %p47 = scmp.eq.s32.totalorder %s9, 1
    %p48 = scmp.ne.s32.totalorder %s43, %s45
    %p49 = scmp.eq.s32.totalorder %s9, 0
    %p50 = por %p48, %p49
    %p51 = scmp.ne.s32.totalorder %s43, %s45
    %p52 = scmp.eq.s32.totalorder %s14, 1
    %p53 = por %p51, %p52
    %p54 = scmp.ne.s32.totalorder %s45, %s46
    %p55 = scmp.eq.s32.totalorder %s14, 0
    %p56 = por %p54, %p55
    %p57 = scmp.ne.s32.totalorder %s45, %s46
    %p58 = scmp.eq.s32.totalorder %s15, 1
    %p59 = por %p57, %p58
    %p61 = scmp.ne.s32.totalorder %s46, %s60
    %p62 = scmp.eq.s32.totalorder %s15, 0
    %p63 = por %p61, %p62
    %s65 = sadd.s32 %s64, 1
    %p68 = scmp.eq.s32.totalorder %s9, 1
    %p69 = scmp.ne.s32.totalorder %s64, %s66
    %p70 = scmp.eq.s32.totalorder %s9, 0
    %p71 = por %p69, %p70
    %p72 = scmp.ne.s32.totalorder %s64, %s66
    %p73 = scmp.eq.s32.totalorder %s14, 1
    %p74 = por %p72, %p73
    %p75 = scmp.ne.s32.totalorder %s66, %s67
    %p76 = scmp.eq.s32.totalorder %s14, 0
    %p77 = por %p75, %p76
    %p78 = scmp.ne.s32.totalorder %s66, %s67
    %p79 = scmp.eq.s32.totalorder %s15, 1
    %p80 = por %p78, %p79
    %p82 = scmp.ne.s32.totalorder %s67, %s81
    %p83 = scmp.eq.s32.totalorder %s15, 0
    %p84 = por %p82, %p83
    %s85 = ssub.s32 %s9, %s16
    %p86 = scmp.eq.s32.totalorder %s85, 0
    %s88 = sadd.s32 %s87, 1
    %s89 = scalar_select %p86, %s87, %s88
    %p92 = pneg %p86
    %p93 = scmp.eq.s32.totalorder %s9, 1
    %p94 = por %p92, %p93
    %p95 = scmp.ne.s32.totalorder %s87, %s90
    %p96 = scmp.eq.s32.totalorder %s9, 0
    %p97 = por %p95, %p96
    %p98 = scmp.ne.s32.totalorder %s87, %s90
    %p99 = scmp.eq.s32.totalorder %s14, 1
    %p100 = por %p98, %p99
    %p101 = scmp.ne.s32.totalorder %s90, %s91
    %p102 = scmp.eq.s32.totalorder %s14, 0
    %p103 = por %p101, %p102
    %p104 = scmp.ne.s32.totalorder %s90, %s91
    %p105 = scmp.eq.s32.totalorder %s15, 1
    %p106 = por %p104, %p105
    %p108 = scmp.ne.s32.totalorder %s91, %s107
    %p109 = scmp.eq.s32.totalorder %s15, 0
    %p110 = por %p108, %p109
    %p111 = scmp.le.s32.totalorder 1, %s9
    %p112 = scmp.lt.s32.totalorder %s9, 3
    %p113 = pnand %p111, %p112
    %p114 = pneg %p113
    // Predicated region
    $region9: #{grn.1} parent=5 // pred_check
      _
    $region10: #{grn.1} parent=5 // pred_check_branch
      %116 = sbr.rel (%p113) target = $region12
    $region11: #{grn.1} parent=5 // pred_region
      %s117 = ssub.s32 %s9, 1
      // Predicated region
      $region13: #{grn.1} parent=11 // pred_check
        %p118 = pneg %p56
      $region14: #{grn.1} parent=11 // pred_check_branch
        %120 = sbr.rel (%p118) target = $region16
      $region15: #{grn.1} parent=11 // pred_region
        _
      $region16: #{grn.1} parent=11 // pred_fallthru
        _
      // Predicated region
      $region17: #{grn.1} parent=11 // pred_check
        %p121 = pneg %p77
      $region18: #{grn.1} parent=11 // pred_check_branch
        %123 = sbr.rel (%p121) target = $region20
      $region19: #{grn.1} parent=11 // pred_region
        _
      $region20: #{grn.1} parent=11 // pred_fallthru
        _
    $region12: #{grn.1} parent=5 // pred_fallthru
      _
    %p124 = scmp.lt.s32.totalorder %s9, 2
    // Predicated region
    $region21: #{grn.1} parent=5 // pred_check
      %p125 = pneg %p124
    $region22: #{grn.1} parent=5 // pred_check_branch
      %127 = sbr.rel (%p125) target = $region24
    $region23: #{grn.1} parent=5 // pred_region
      // Predicated region
      $region25: #{grn.1} parent=23 // pred_check
        %p128 = pneg %p29
      $region26: #{grn.1} parent=23 // pred_check_branch
        %130 = sbr.rel (%p128) target = $region28
      $region27: #{grn.1} parent=23 // pred_region
        %p131 = scmp.lt.s32.totalorder %s9, 1
        %s132 = scalar_select %p131, %s9, 1
        %s133 = smul.addr %s132, 8
        %s134 = smul.addr %s133, 8
        %s135 = scalar_lea.vmem %s0, %s134
      $region28: #{grn.1} parent=23 // pred_fallthru
        _
    $region24: #{grn.1} parent=5 // pred_fallthru
      _
    %p136 = scmp.le.s32.totalorder 1, %s9
    %p137 = scmp.lt.s32.totalorder %s9, 3
    %p138 = pnand %p136, %p137
    %p139 = pneg %p138
    // Predicated region
    $region29: #{grn.1} parent=5 // pred_check
      _
    $region30: #{grn.1} parent=5 // pred_check_branch
      %141 = sbr.rel (%p138) target = $region32
    $region31: #{grn.1} parent=5 // pred_region
      %s142 = ssub.s32 %s9, 1
      %p143 = scmp.lt.s32.totalorder %s14, 1
      %s144 = scalar_select %p143, %s14, 1
      %s145 = smul.addr %s144, 8
      %s146 = smul.addr %s145, 8
      %s147 = scalar_lea.vmem %s0, %s146
      %p148 = pneg %p35
      %p149 = pneg %p32
      %p150 = pneg %p56
      %p151 = pneg %p53
      %p152 = pneg %p77
      %p153 = pneg %p74
      %p154 = pneg %p103
      %p155 = pneg %p100
      %p156 = scmp.lt.s32.totalorder %s14, 1
      %s157 = scalar_select %p156, %s14, 1
      %s158 = smul.addr %s157, 8
      %s159 = smul.addr %s158, 8
      %s160 = scalar_lea.vmem %s3, %s159
      %p161 = scmp.lt.s32.totalorder %s14, 1
      %s162 = scalar_select %p161, %s14, 1
      %s163 = smul.addr %s162, 8
      %s164 = smul.addr %s163, 8
      %s165 = scalar_lea.vmem %s0, %s164
      %p166 = scmp.lt.s32.totalorder %s14, 1
      %s167 = scalar_select %p166, %s14, 1
      %s168 = smul.addr %s167, 8
      %s169 = smul.addr %s168, 8
      %s170 = scalar_lea.vmem %s3, %s169
      %v171 = vld [vmem:[%s165] sm:$0xff]
      %v172 = vld [vmem:[%s165 + $0x8] sm:$0xff]
      %v173 = vld [vmem:[%s165 + $0x10] sm:$0xff]
      %v174 = vld [vmem:[%s165 + $0x18] sm:$0xff]
      %v175 = vld [vmem:[%s165 + $0x20] sm:$0xff]
      %v176 = vld [vmem:[%s165 + $0x28] sm:$0xff]
      %v177 = vld [vmem:[%s165 + $0x30] sm:$0xff]
      %v178 = vld [vmem:[%s165 + $0x38] sm:$0xff]
      %v179 = vmul.f32 %v171, %v171
      %v180 = vmul.f32 %v172, %v172
      %v181 = vmul.f32 %v173, %v173
      %v182 = vmul.f32 %v174, %v174
      %v183 = vmul.f32 %v175, %v175
      %v184 = vmul.f32 %v176, %v176
      %v185 = vmul.f32 %v177, %v177
      %v186 = vmul.f32 %v178, %v178
      %v187 = vadd.f32 %v179, %v180
      %v188 = vadd.f32 %v187, %v181
      %v189 = vadd.f32 %v188, %v182
      %v190 = vadd.f32 %v189, %v183
      %v191 = vadd.f32 %v190, %v184
      %v192 = vadd.f32 %v191, %v185
      %v193 = vadd.f32 %v192, %v186
      %v194 = vrot.slane %v193, 4
      %v195 = vadd.f32 %v193, %v194
      %v196 = vrot.slane %v195, 2
      %v197 = vadd.f32 %v195, %v196
      %v198 = vrot.slane %v197, 1
      %v199 = vadd.f32 %v197, %v198
      %200 = vrot.lane.b32.xlu0 %v199, 32
      %v201 = vpop.permute.xlu0 %200
      %v202 = vadd.f32 %v199, %v201
      %203 = vrot.lane.b32.xlu0 %v202, 64
      %v204 = vpop.permute.xlu0 %203
      %v205 = vadd.f32 %v202, %v204
      %v206 = vrsqrt.pop %v205
      %v207 = vmul.f32 %v206, %v205
      %v208 = vmul.f32 %v207, %v206
      %v209 = vmul.f32 0.5, %v208
      %v210 = vsub.f32 1.5, %v209
      %v211 = vmul.f32 %v206, %v210
      %v212 = vmul.f32 %v205, %v211
      %vm213 = vcmp.eq.f32.partialorder %v205, inf
      %v214 = vsel %vm213, %v205, %v212
      %vm215 = vcmp.eq.f32.partialorder %v205, 0.0
      %v216 = vand.u32 %v205, 2147483648
      %v217 = vsel %vm215, %v216, %v214
      %vm218 = vcmask 1040384
      %v219 = vsel %vm218, %v217, 0.0
      %220 = vadd.xlane.f32.xlu0 %v219
      %v221 = vpop.xlane.xlu0 %220
      %v222 = vrcp.pop 128.0
      %v223 = vmul.f32 128.0, %v222
      %v224 = vsub.f32 1.0, %v223
      %v225 = vmul.f32 %v222, %v224
      %v226 = vadd.f32 %v222, %v225
      %vm227 = vweird.f32 %v222
      %v228 = vsel %vm227, %v222, %v226
      %v229 = vmul.f32 %v221, %v228
      %v230 = vadd.f32 %v229, 1e-06
      %v231 = vrcp.pop %v230
      %v232 = vmul.f32 %v230, %v231
      %v233 = vsub.f32 2.0, %v232
      %v234 = vmul.f32 %v231, %v233
      %v235 = vmul.f32 %v230, %v234
      %v236 = vsub.f32 2.0, %v235
      %v237 = vmul.f32 %v234, %v236
      %v238 = vld [vmem:[%s1] sm:$0x1]
      %v239 = vmul.f32 %v217, %v237
      %v240 = vmul.f32 %v238, %v239
      %v241 = vadd.f32 %v240, 1.0
      %v243 = vperm.slane %v241, 0
      %v245 = vmul.f32 %v171, %v243
      %v246 = vmul.f32 %v172, %v243
      %v247 = vmul.f32 %v173, %v243
      %v248 = vmul.f32 %v174, %v243
      %v249 = vmul.f32 %v175, %v243
      %v250 = vmul.f32 %v176, %v243
      %v251 = vmul.f32 %v177, %v243
      %v252 = vmul.f32 %v178, %v243
      %v253 = vld [vmem:[%s2] sm:$0x1]
      %v255 = vperm.slane %v253, 0
      %v257 = vadd.f32 %v245, %v255
      %v258 = vadd.f32 %v246, %v255
      %v259 = vadd.f32 %v247, %v255
      %v260 = vadd.f32 %v248, %v255
      %v261 = vadd.f32 %v249, %v255
      %v262 = vadd.f32 %v250, %v255
      %v263 = vadd.f32 %v251, %v255
      %v264 = vadd.f32 %v252, %v255
      %265 = vst [vmem:[%s170] sm:$0xff] %v257
      %266 = vst [vmem:[%s170 + $0x8] sm:$0xff] %v258
      %267 = vst [vmem:[%s170 + $0x10] sm:$0xff] %v259
      %268 = vst [vmem:[%s170 + $0x18] sm:$0xff] %v260
      %269 = vst [vmem:[%s170 + $0x20] sm:$0xff] %v261
      %270 = vst [vmem:[%s170 + $0x28] sm:$0xff] %v262
      %271 = vst [vmem:[%s170 + $0x30] sm:$0xff] %v263
      %272 = vst [vmem:[%s170 + $0x38] sm:$0xff] %v264
      %p273 = scmp.lt.s32.totalorder %s14, 1
      %s274 = scalar_select %p273, %s14, 1
      %s275 = smul.addr %s274, 8
      %s276 = smul.addr %s275, 8
      %s277 = scalar_lea.vmem %s3, %s276
      // Predicated region
      $region33: #{grn.1} parent=31 // pred_check
        %p278 = pneg %p100
      $region34: #{grn.1} parent=31 // pred_check_branch
        %280 = sbr.rel (%p278) target = $region36
      $region35: #{grn.1} parent=31 // pred_region
        _
      $region36: #{grn.1} parent=31 // pred_fallthru
        _
    $region32: #{grn.1} parent=5 // pred_fallthru
      _
    %p281 = scmp.le.s32.totalorder 2, %s9
    // Predicated region
    $region37: #{grn.1} parent=5 // pred_check
      %p282 = pneg %p281
    $region38: #{grn.1} parent=5 // pred_check_branch
      %284 = sbr.rel (%p282) target = $region40
    $region39: #{grn.1} parent=5 // pred_region
      %s285 = ssub.s32 %s9, 2
      // Predicated region
      $region41: #{grn.1} parent=39 // pred_check
        %p286 = pneg %p106
      $region42: #{grn.1} parent=39 // pred_check_branch
        %288 = sbr.rel (%p286) target = $region44
      $region43: #{grn.1} parent=39 // pred_region
        %p289 = scmp.lt.s32.totalorder %s15, 1
        %s290 = scalar_select %p289, %s15, 1
        %s291 = smul.addr %s290, 8
        %s292 = smul.addr %s291, 8
        %s293 = scalar_lea.vmem %s3, %s292
      $region44: #{grn.1} parent=39 // pred_fallthru
        _
    $region40: #{grn.1} parent=5 // pred_fallthru
      _
  $region6: #{grn.1} parent=0 // loop_footer
    %s13 = sadd.s32 1, %s9
  $region7: #{grn.1} parent=0 // loop_footer_branch
    %8 = sbr.rel target = $region3
  $region8: #{grn.1} parent=0 // loop_exit
    _

</llo_original>
